<compile_context>
chip_gen: v5e
topology: v5e:2x2
jax: 0.10.0
libtpu: 0.0.40
codegen_flags: <defaults>
</compile_context>

<pallas_src>
import jax
import jax.numpy as jnp
from jax.experimental import pallas as pl
from jax.experimental.pallas import tpu as pltpu

_LANES = 128
_MAX_TILE_ROWS = 2048  # 2048 rows x 128 lanes x 4 B = 1 MiB f32 per block


def _tanh_kernel(x_ref, o_ref):
    # Single transcendental on the EUP slot; no dtype round-trip.
    o_ref[...] = jnp.tanh(x_ref[...])


def _tanh_2d(x2d: jax.Array, tile_rows: int) -> jax.Array:
    rows, lanes = x2d.shape
    grid = (pl.cdiv(rows, tile_rows),)
    return pl.pallas_call(
        _tanh_kernel,
        out_shape=jax.ShapeDtypeStruct((rows, lanes), x2d.dtype),
        grid_spec=pltpu.PrefetchScalarGridSpec(
            num_scalar_prefetch=0,
            grid=grid,
            in_specs=[pl.BlockSpec((tile_rows, lanes), lambda i: (i, 0))],
            out_specs=pl.BlockSpec((tile_rows, lanes), lambda i: (i, 0)),
        ),
        compiler_params=pltpu.CompilerParams(
            dimension_semantics=("parallel",)),
    )(x2d)


def tanh_pallas(x: jax.Array) -> jax.Array:
    """Elementwise tanh matching torch.Tensor.tanh() semantics, any shape/dtype."""
    orig_shape = x.shape
    n = x.size
    if n == 0:
        return x

    if n % _LANES == 0:
        # No-copy path: reshape is metadata only on a contiguous array.
        rows = n // _LANES
        tile_rows = rows if rows <= _MAX_TILE_ROWS else _MAX_TILE_ROWS
        out2d = _tanh_2d(x.reshape(rows, _LANES), tile_rows)
        return out2d.reshape(orig_shape)

    # Rare ragged case (numel not a multiple of 128): pad only the tail.
    # TODO(synk): handle the <128-element tail outside the kernel to avoid this copy.
    pad = _LANES - (n % _LANES)
    flat = jnp.pad(x.reshape(-1), (0, pad))
    rows = flat.size // _LANES
    tile_rows = rows if rows <= _MAX_TILE_ROWS else _MAX_TILE_ROWS
    out2d = _tanh_2d(flat.reshape(rows, _LANES), tile_rows)
    return out2d.reshape(-1)[:n].reshape(orig_shape)


class Tanh:
    """JAX/Pallas counterpart of the PyTorch Tanh module.

    `inplace` has no meaning in a functional setting (JAX arrays are
    immutable); it is accepted for interface parity and ignored.
    """

    def __init__(self, inplace: bool = False):
        self.inplace = inplace  # no-op in JAX

    def __call__(self, x: jax.Array) -> jax.Array:
        return tanh_pallas(x)


if __name__ == "__main__":
    key = jax.random.PRNGKey(0)
    x = jax.random.normal(key, (2, 4, 16, 16), dtype=jnp.float32)  # NCHW

    mod = Tanh(inplace=False)
    y = mod(x)
    y = jax.block_until_ready(y)

    # correctness check against pure-JAX reference
    y_ref = jnp.tanh(x)
    assert y.shape == x.shape and y.dtype == x.dtype
    assert jnp.max(jnp.abs(y - y_ref)) < 1e-5

    print("KERNEL_OK")
</pallas_src>

<mosaic_0001>
module attributes {stable_mosaic.version = 11 : i64} {
  func.func @_tanh_kernel(%arg0: i32, %arg1: memref<16x128xf32, #tpu.memory_space<vmem>>, %arg2: memref<16x128xf32, #tpu.memory_space<vmem>>) attributes {dimension_semantics = [#tpu.dimension_semantics<parallel>], iteration_bounds = array<i64: 1>, scalar_prefetch = 0 : i64, scratch_operands = 0 : i64, tpu.core_type = #tpu.core_type<tc>, window_params = [{transform_indices = @transform_0, window_bounds = array<i64: 16, 128>}, {transform_indices = @transform_1, window_bounds = array<i64: 16, 128>}]} {
    %c0 = arith.constant 0 : index
    %c0_0 = arith.constant 0 : index
    %0 = vector.load %arg1[%c0, %c0_0] : memref<16x128xf32, #tpu.memory_space<vmem>>, vector<16x128xf32>
    %1 = math.tanh %0 : vector<16x128xf32>
    %c0_1 = arith.constant 0 : index
    %c0_2 = arith.constant 0 : index
    %2 = vector.load %arg2[%c0_1, %c0_2] : memref<16x128xf32, #tpu.memory_space<vmem>>, vector<16x128xf32>
    tpu.vector_store %arg2[%c0_1, %c0_2], %1 {strides = array<i32>} : memref<16x128xf32, #tpu.memory_space<vmem>>, vector<16x128xf32>,
    return
  }
  func.func @transform_0(%arg0: i32) -> (i32, i32) {
    %c0_i32 = arith.constant 0 : i32
    %c0_i32_0 = arith.constant 0 : i32
    return %arg0, %c0_i32 : i32, i32
  }
  func.func @transform_1(%arg0: i32) -> (i32, i32) {
    %c0_i32 = arith.constant 0 : i32
    %c0_i32_0 = arith.constant 0 : i32
    return %arg0, %c0_i32 : i32, i32
  }
}

</mosaic_0001>

<llo_original>
// kernel: tpu_custom_call.1
$region0: #{tpu_custom_call.1}
  #allocation0 [shape = 'u32[]', space=smem, size = 0x4, offset = 0x4, fixed_abs, tag = 'smem constant byte address 0x4 - core index']
  #allocation1 [shape = 'u32[72,128]{1,0:T(1,128)}', space=vmem, size = 0x9000, scoped, tag = 'internal scratch']
  %s0 = inlined_call_operand.hbm [shape: f32[16,128], index: 0, kind: input, shape index: {}]
  %s1 = inlined_call_operand.hbm [shape: f32[16,128], index: 1, kind: output, shape index: {}]
  %s2 = sld [smem:[#allocation0]]
  $region18: #{tpu_custom_call.1} parent=0
    _
  %s4 = ssub.s32 1, %s2
  %s5 = scalar_select 0, %s4, %s2
  $region1: #{tpu_custom_call.1} parent=0
    #allocation2 [shape = 'u8[8192]{0}', space=vmem, size = 0x2000, scoped, tag = 'input window, operand 0, single buffered']
    #allocation3 [shape = 's32[1]{0}', space=sflag, size = 0x4, scoped, tag = 'scoped memory for tpu_custom_call.1']
    #allocation4 [shape = 's32[1]{0}', space=sflag, size = 0x4, scoped, tag = 'scoped memory for tpu_custom_call.1']
    #allocation5 [shape = 'u8[8192]{0}', space=vmem, size = 0x2000, scoped, tag = 'output window, operand 0, single buffered']
    %6 = vsyncpa [#allocation3], 0
    %7 = vsyncpa [#allocation4], 0
    // Predicated region
    $region2: #{tpu_custom_call.1} parent=1 // pred_check
      _
    $region3: #{tpu_custom_call.1} parent=1 // pred_check_branch
      %9 = sbr.rel (0) target = $region5
    $region4: #{tpu_custom_call.1} parent=1 // pred_region
      %11 = vsyncadd [#allocation3], 0
      %s12 = sshll.u32 %s0, 4
      %s13 = int_to_ptr.hbm [resolvable:$true] %s12
      %s14 = sshll.u32 [#allocation2], 4
      %s15 = int_to_ptr.vmem [resolvable:$true] %s14
      %20 = dma.hbm_to_vmem [thread:$0]  %s13, 256, %s15, [#allocation3], 128, 128, 8
    $region5: #{tpu_custom_call.1} parent=1 // pred_fallthru
      _
    // Predicated region
    $region6: #{tpu_custom_call.1} parent=1 // pred_check
      _
    $region7: #{tpu_custom_call.1} parent=1 // pred_check_branch
      %22 = sbr.rel (0) target = $region9
    $region8: #{tpu_custom_call.1} parent=1 // pred_region
      %24 = dma.done [#allocation3], 256
    $region9: #{tpu_custom_call.1} parent=1 // pred_fallthru
      _
    %v25 = vld [vmem:[#allocation2] sm:$0xff]
    %v26 = vld [vmem:[#allocation2 + $0x8] sm:$0xff]
    %v27 = vtanh.pop %v25
    %v28 = vtanh.pop %v26
    %29 = vst [vmem:[#allocation5] sm:$0xff] %v27
    %30 = vst [vmem:[#allocation5 + $0x8] sm:$0xff] %v28
    // Predicated region
    $region10: #{tpu_custom_call.1} parent=1 // pred_check
      _
    $region11: #{tpu_custom_call.1} parent=1 // pred_check_branch
      %32 = sbr.rel (0) target = $region13
    $region12: #{tpu_custom_call.1} parent=1 // pred_region
      %34 = vsyncadd [#allocation4], 0
      %s35 = sshll.u32 [#allocation5], 4
      %s36 = int_to_ptr.vmem [resolvable:$true] %s35
      %s37 = sshll.u32 %s1, 4
      %s38 = int_to_ptr.hbm [resolvable:$true] %s37
      %43 = dma.vmem_to_hbm [thread:$0]  %s36, 256, %s38, [#allocation4], 128, 128, 8
    $region13: #{tpu_custom_call.1} parent=1 // pred_fallthru
      _
    // Predicated region
    $region14: #{tpu_custom_call.1} parent=1 // pred_check
      _
    $region15: #{tpu_custom_call.1} parent=1 // pred_check_branch
      %45 = sbr.rel (0) target = $region17
    $region16: #{tpu_custom_call.1} parent=1 // pred_region
      %47 = dma.done [#allocation4], 256
    $region17: #{tpu_custom_call.1} parent=1 // pred_fallthru
      _
    %48 = vsyncpa [#allocation3], 1
    %49 = vsyncpa [#allocation4], 1

</llo_original>
